<compile_context>
chip_gen: v7x
topology: tpu7x:2x2x1
jax: 0.10.0
libtpu: 0.0.40
codegen_flags: <defaults>
</compile_context>

<pallas_src>
import jax
import jax.numpy as jnp
from jax.experimental import pallas as pl
from jax.experimental.pallas import tpu as pltpu

_LANE = 128
# Raised scoped-VMEM cap: above the 16/32 MiB defaults (v5e/v6e) so big HW tiles
# keep double-buffering, while staying under v7x's 64 MiB physical VMEM.
_VMEM_LIMIT = 48 * 1024 * 1024


def _pick_tile(total, target):
    """Largest lane-aligned (multiple of 128) divisor of `total` that is <= target;
    falls back to the full extent (always a legal block) if none exists."""
    best = total
    t = 128
    while t <= min(total, target):
        if total % t == 0:
            best = t
        t += 128
    return best


# ----------------------------------------------------------------------------
# Kernel 1: vision encoder projection (1x1 conv == per-token matmul + bias),
# consuming channels-first input and producing channels-first vision memory.
# ----------------------------------------------------------------------------
def _proj_kernel(x_ref, wt_ref, b_ref, o_ref):
    # x_ref: (1, C, T)  wt_ref: (Dp, C)  b_ref: (Dp, 1)  o_ref: (1, Dp, T)
    x = x_ref[0].astype(jnp.bfloat16)        # (C, T)  bf16 MXU feed, f32 acc
    wt = wt_ref[...].astype(jnp.bfloat16)    # (Dp, C)
    y = jnp.dot(wt, x, preferred_element_type=jnp.float32)   # (Dp, T) — NN dot
    o_ref[0] = y + b_ref[...]                # per-channel bias, broadcast over lanes


def proj_pallas(x_cm, wt, b, *, hw_tile=None):
    # x_cm: (B, C, HW) float32 (channels-first), wt: (Dp, C), b: (Dp, 1)
    B, C, HW = x_cm.shape
    Dp = wt.shape[0]
    T = hw_tile if (hw_tile and HW % hw_tile == 0) else _pick_tile(HW, hw_tile or 512)
    grid = (B, HW // T)
    return pl.pallas_call(
        _proj_kernel,
        out_shape=jax.ShapeDtypeStruct((B, Dp, HW), jnp.float32),
        grid_spec=pltpu.PrefetchScalarGridSpec(
            num_scalar_prefetch=0,
            grid=grid,
            in_specs=[
                pl.BlockSpec((1, C, T), lambda bb, t: (bb, 0, t)),
                pl.BlockSpec((Dp, C), lambda bb, t: (0, 0)),
                pl.BlockSpec((Dp, 1), lambda bb, t: (0, 0)),
            ],
            out_specs=pl.BlockSpec((1, Dp, T), lambda bb, t: (bb, 0, t)),
        ),
        compiler_params=pltpu.CompilerParams(
            dimension_semantics=("parallel", "parallel"),
            vmem_limit_bytes=_VMEM_LIMIT),
    )(x_cm, wt, b)


# ----------------------------------------------------------------------------
# Kernel 2: region decoder cross-attention (flash-style online softmax over
# KV tiles).  Memory is channels-first (Dp, HW) so both matmuls are transpose-free.
# ----------------------------------------------------------------------------
def _xattn_kernel(q_ref, kvt_ref, o_ref, m_sc, l_sc, acc_sc):
    # q_ref: (Nq, Dp)  kvt_ref: (1, Dp, Tk)  o_ref: (1, Nq, Dp)
    kvi = pl.program_id(1)

    @pl.when(kvi == 0)
    def _():
        m_sc[...] = jnp.full_like(m_sc, -jnp.inf)
        l_sc[...] = jnp.zeros_like(l_sc)
        acc_sc[...] = jnp.zeros_like(acc_sc)

    q = q_ref[...].astype(jnp.bfloat16)      # (Nq, Dp), pre-scaled by 1/sqrt(d)
    kvt = kvt_ref[0].astype(jnp.bfloat16)    # (Dp, Tk)

    # scores: plain NN matmul, no kv transpose needed with channels-first memory.
    s = jnp.dot(q, kvt, preferred_element_type=jnp.float32)          # (Nq, Tk)
    # TODO(synk): key-padding mask omitted — this vision_encoder realization
    # always emits an all-valid mask; for padded keys add a precomputed additive
    # bias tile here (s += bias_ref[...]).

    m_prev = m_sc[...]
    m_new = jnp.maximum(m_prev, s.max(axis=-1, keepdims=True))
    alpha = jnp.exp(m_prev - m_new)
    p = jnp.exp(s - m_new)                                            # (Nq, Tk)
    l_sc[...] = alpha * l_sc[...] + p.sum(axis=-1, keepdims=True)
    # P @ V: contract the key axis of both (NT form), again no transpose.
    pv = jax.lax.dot_general(p.astype(jnp.bfloat16), kvt,
                             dimension_numbers=(((1,), (1,)), ((), ())),
                             preferred_element_type=jnp.float32)      # (Nq, Dp)
    acc_sc[...] = alpha * acc_sc[...] + pv
    m_sc[...] = m_new

    @pl.when(kvi == pl.num_programs(1) - 1)
    def _():
        o_ref[0] = (acc_sc[...] *
                    pl.reciprocal(l_sc[...], approx=True)).astype(o_ref.dtype)


def cross_attention_pallas(q, memory_cf, *, kv_tile=None):
    # q: (Nq, Dp) pre-scaled queries (shared across batch — no HBM broadcast)
    # memory_cf: (B, Dp, HW) channels-first vision memory
    Nq, Dp = q.shape
    B, _, HW = memory_cf.shape
    Tk = kv_tile if (kv_tile and HW % kv_tile == 0) else _pick_tile(HW, kv_tile or 512)
    grid = (B, HW // Tk)
    return pl.pallas_call(
        _xattn_kernel,
        out_shape=jax.ShapeDtypeStruct((B, Nq, Dp), jnp.float32),
        grid_spec=pltpu.PrefetchScalarGridSpec(
            num_scalar_prefetch=0,
            grid=grid,
            in_specs=[
                pl.BlockSpec((Nq, Dp), lambda bb, k: (0, 0)),
                pl.BlockSpec((1, Dp, Tk), lambda bb, k: (bb, 0, k)),
            ],
            out_specs=pl.BlockSpec((1, Nq, Dp), lambda bb, k: (bb, 0, 0)),
            scratch_shapes=[
                pltpu.VMEM((Nq, 1), jnp.float32),    # running max
                pltpu.VMEM((Nq, 1), jnp.float32),    # running denom
                pltpu.VMEM((Nq, Dp), jnp.float32),   # output accumulator
            ]),
        compiler_params=pltpu.CompilerParams(
            dimension_semantics=("parallel", "arbitrary"),
            vmem_limit_bytes=_VMEM_LIMIT),
    )(q, memory_cf)


# ----------------------------------------------------------------------------
# Parameter init (deterministic, mirrors the module's __init__ shapes).
# hidden_dim is zero-padded to a lane-dense Dp = ceil(D/128)*128; padded lanes
# are exact zeros everywhere so they never change the math.
# ----------------------------------------------------------------------------
def init_params(key, in_channels, hidden_dim, num_entities, num_regions):
    Dp = ((hidden_dim + _LANE - 1) // _LANE) * _LANE
    k1, k2, k3 = jax.random.split(key, 3)
    # vision_encoder 1x1 conv: PyTorch weight layout is (D, C[,1,1]) -> keep (Dp, C)
    w = jax.random.normal(k1, (hidden_dim, in_channels), jnp.float32) * 0.02
    ent = jax.random.normal(k2, (num_entities, hidden_dim), jnp.float32)
    reg = jax.random.normal(k3, (num_regions, hidden_dim), jnp.float32)
    pad_d = Dp - hidden_dim
    return {
        "w_proj": jnp.pad(w, ((0, pad_d), (0, 0))),            # (Dp, C)
        "b_proj": jnp.zeros((Dp, 1), jnp.float32),              # (Dp, 1)
        "entity_emb": jnp.pad(ent, ((0, 0), (0, pad_d))),       # (num_entities, Dp)
        "region_emb": jnp.pad(reg, ((0, 0), (0, pad_d))),       # (num_regions, Dp)
    }


def sine_pos_embedding(H, W, D):
    # glue: simple sine/cosine positional embedding over the flattened grid
    pos = jnp.arange(H * W, dtype=jnp.float32)[:, None]
    dim = jnp.arange(D // 2, dtype=jnp.float32)[None, :]
    freq = jnp.exp(-jnp.log(10000.0) * (2.0 * dim / D))
    ang = pos * freq
    return jnp.concatenate([jnp.sin(ang), jnp.cos(ang)], axis=-1)   # (HW, D)


# ----------------------------------------------------------------------------
# RGG.forward
# ----------------------------------------------------------------------------
def rgg_forward(img, params, hidden_dim, *, hw_tile=None, kv_tile=None):
    """img: (B, C, H, W) float32 (NCHW, as in PyTorch). Returns vision (B, HW, hidden_dim)."""
    B, C, H, W = img.shape
    HW = H * W

    # ---- vision_encoder(img) -> vision, vision_msk, vision_pos ----
    # Stay channels-first: merging H,W into HW is a free reshape; the kernel
    # contracts the channel axis directly (no NCHW->NHWC HBM transpose pass).
    x_cm = img.reshape(B, C, HW)                                        # (B, C, HW)
    vision_cf = proj_pallas(x_cm, params["w_proj"], params["b_proj"],
                            hw_tile=hw_tile)                            # (B, Dp, HW)
    # All pixels valid -> key-padding mask is all zeros; kept implicit (the
    # attention kernel skips the dead mask term).
    _vision_pos = sine_pos_embedding(H, W, hidden_dim)                  # glue, unused below

    # ---- region_decoder(entity, region, memory, memory_key_padding_mask) ----
    # TODO(synk): region_decoder internals are not defined in the source module;
    # realized as one cross-attention of (entity ++ region) queries over vision.
    scale = 1.0 / jnp.sqrt(jnp.float32(hidden_dim))                     # fold into q
    q = jnp.concatenate([params["entity_emb"], params["region_emb"]], 0) * scale
    reg = cross_attention_pallas(q, vision_cf, kv_tile=kv_tile)
    del reg  # discarded, exactly as in the PyTorch forward.  NOTE: under jit this
             # pallas_call is dead code and will be eliminated (no side effects
             # declared); it executes in eager mode / whenever its output is used.

    # Module returns the encoder features, tokens-first.  Transposing here is the
    # cheap side (D << backbone C at DETR scale) vs. transposing the input image.
    return jnp.swapaxes(vision_cf, 1, 2)[..., :hidden_dim]              # (B, HW, D)


# ----------------------------------------------------------------------------
if __name__ == "__main__":
    B, C, H, W = 2, 4, 16, 16
    hidden_dim, num_entities, num_regions = 32, 8, 8

    key = jax.random.PRNGKey(0)
    k_img, k_par = jax.random.split(key)
    img = jax.random.normal(k_img, (B, C, H, W), jnp.float32)
    params = init_params(k_par, C, hidden_dim, num_entities, num_regions)

    # Small tiles so the demo exercises the multi-tile projection grid and the
    # multi-step online-softmax accumulation (HW = 256 -> 2 HW tiles, 2 KV tiles).
    vision = rgg_forward(img, params, hidden_dim, hw_tile=128, kv_tile=128)
    jax.block_until_ready(vision)
    assert vision.shape == (B, H * W, hidden_dim)

    # --- reference check: projection (bf16 MXU inputs, f32 accumulation) ---
    HW = H * W
    x_cm = img.reshape(B, C, HW)
    xb = x_cm.astype(jnp.bfloat16)
    wb = params["w_proj"].astype(jnp.bfloat16)
    ref_cf = jnp.einsum("dc,bct->bdt", wb, xb,
                        preferred_element_type=jnp.float32) + params["b_proj"][None]
    ref_vision = jnp.swapaxes(ref_cf, 1, 2)[..., :hidden_dim]
    assert jnp.allclose(vision, ref_vision, atol=1e-2, rtol=1e-2), \
        float(jnp.max(jnp.abs(vision - ref_vision)))

    # --- reference check: cross-attention kernel (module discards `reg`;
    #     validate it directly here) ---
    vision_cf = proj_pallas(x_cm, params["w_proj"], params["b_proj"], hw_tile=128)
    scale = 1.0 / jnp.sqrt(jnp.float32(hidden_dim))
    q = jnp.concatenate([params["entity_emb"], params["region_emb"]], 0) * scale
    reg = cross_attention_pallas(q, vision_cf, kv_tile=128)
    jax.block_until_ready(reg)

    qb = q.astype(jnp.bfloat16).astype(jnp.float32)
    kvb = jnp.swapaxes(vision_cf, 1, 2).astype(jnp.bfloat16).astype(jnp.float32)
    s = jnp.einsum("nd,btd->bnt", qb, kvb)
    p = jax.nn.softmax(s, axis=-1)
    ref_reg = jnp.einsum("bnt,btd->bnd",
                         p.astype(jnp.bfloat16).astype(jnp.float32), kvb)
    assert jnp.allclose(reg, ref_reg, atol=1e-2, rtol=1e-2), \
        float(jnp.max(jnp.abs(reg - ref_reg)))

    print("KERNEL_OK")
</pallas_src>

<mosaic_0001>
module attributes {stable_mosaic.version = 11 : i64} {
  func.func @_proj_kernel(%arg0: i32, %arg1: i32, %arg2: memref<1x4x128xf32, #tpu.memory_space<vmem>>, %arg3: memref<128x4xf32, #tpu.memory_space<vmem>>, %arg4: memref<128x1xf32, #tpu.memory_space<vmem>>, %arg5: memref<1x128x128xf32, #tpu.memory_space<vmem>>) attributes {dimension_semantics = [#tpu.dimension_semantics<parallel>, #tpu.dimension_semantics<parallel>], iteration_bounds = array<i64: 2, 2>, scalar_prefetch = 0 : i64, scratch_operands = 0 : i64, tpu.core_type = #tpu.core_type<tc>, window_params = [{transform_indices = @transform_0, window_bounds = array<i64: 1, 4, 128>}, {pipeline_mode = #tpu.pipeline_mode<synchronous>, transform_indices = @transform_1, window_bounds = array<i64: 128, 4>}, {pipeline_mode = #tpu.pipeline_mode<synchronous>, transform_indices = @transform_2, window_bounds = array<i64: 128, 1>}, {transform_indices = @transform_3, window_bounds = array<i64: 1, 128, 128>}]} {
    %c0 = arith.constant 0 : index
    %c0_0 = arith.constant 0 : index
    %c0_1 = arith.constant 0 : index
    %0 = vector.load %arg2[%c0, %c0_0, %c0_1] : memref<1x4x128xf32, #tpu.memory_space<vmem>>, vector<1x4x128xf32>
    %1 = vector.shape_cast %0 : vector<1x4x128xf32> to vector<4x128xf32>
    %2 = arith.truncf %1 : vector<4x128xf32> to vector<4x128xbf16>
    %c0_2 = arith.constant 0 : index
    %c0_3 = arith.constant 0 : index
    %3 = vector.load %arg3[%c0_2, %c0_3] : memref<128x4xf32, #tpu.memory_space<vmem>>, vector<128x4xf32>
    %4 = arith.truncf %3 : vector<128x4xf32> to vector<128x4xbf16>
    %cst = arith.constant dense<0.000000e+00> : vector<128x128xf32>
    %5 = tpu.matmul %4, %2, %cst {dimension_numbers = #tpu.dot_dimension_numbers<[1], [0], [0], [1], [0, 0, 1, 1], [], []>} : vector<128x4xbf16>, vector<4x128xbf16>, vector<128x128xf32> -> vector<128x128xf32>
    %c0_4 = arith.constant 0 : index
    %c0_5 = arith.constant 0 : index
    %6 = vector.load %arg4[%c0_4, %c0_5] : memref<128x1xf32, #tpu.memory_space<vmem>>, vector<128x1xf32>
    %7 = vector.broadcast %6 : vector<128x1xf32> to vector<128x128xf32>
    %8 = arith.addf %5, %7 : vector<128x128xf32>
    %c0_6 = arith.constant 0 : index
    %c0_7 = arith.constant 0 : index
    %c0_8 = arith.constant 0 : index
    %9 = vector.load %arg5[%c0_6, %c0_7, %c0_8] : memref<1x128x128xf32, #tpu.memory_space<vmem>>, vector<1x128x128xf32>
    %10 = vector.shape_cast %9 : vector<1x128x128xf32> to vector<128x128xf32>
    %11 = vector.shape_cast %8 : vector<128x128xf32> to vector<1x128x128xf32>
    tpu.vector_store %arg5[%c0_6, %c0_7, %c0_8], %11 {strides = array<i32>} : memref<1x128x128xf32, #tpu.memory_space<vmem>>, vector<1x128x128xf32>,
    return
  }
  func.func @transform_0(%arg0: i32, %arg1: i32) -> (i32, i32, i32) {
    %c0_i32 = arith.constant 0 : i32
    %c0_i32_0 = arith.constant 0 : i32
    return %arg0, %c0_i32, %arg1 : i32, i32, i32
  }
  func.func @transform_1(%arg0: i32, %arg1: i32) -> (i32, i32) {
    %c0_i32 = arith.constant 0 : i32
    %c0_i32_0 = arith.constant 0 : i32
    %c0_i32_1 = arith.constant 0 : i32
    return %c0_i32, %c0_i32_0 : i32, i32
  }
  func.func @transform_2(%arg0: i32, %arg1: i32) -> (i32, i32) {
    %c0_i32 = arith.constant 0 : i32
    %c0_i32_0 = arith.constant 0 : i32
    %c0_i32_1 = arith.constant 0 : i32
    return %c0_i32, %c0_i32_0 : i32, i32
  }
  func.func @transform_3(%arg0: i32, %arg1: i32) -> (i32, i32, i32) {
    %c0_i32 = arith.constant 0 : i32
    %c0_i32_0 = arith.constant 0 : i32
    return %arg0, %c0_i32, %arg1 : i32, i32, i32
  }
}

</mosaic_0001>

<llo_original>
// kernel: tpu_custom_call.1
$region0: #{tpu_custom_call.1}
  #allocation0 [shape = 'u32[]', space=smem, size = 0x4, offset = 0x4, fixed_abs, tag = 'smem constant byte address 0x4 - core index']
  #allocation1 [shape = 'u32[144,128]{1,0:T(1,128)}', space=vmem, size = 0x12000, scoped, tag = 'internal scratch']
  %s0 = inlined_call_operand.vmem [shape: f32[2,4,256], index: 0, kind: input, shape index: {}]
  %s1 = inlined_call_operand.vmem [shape: f32[128,4], index: 1, kind: input, shape index: {}]
  %s2 = inlined_call_operand.vmem [shape: f32[128,1], index: 2, kind: input, shape index: {}]
  %s3 = inlined_call_operand.hbm [shape: f32[2,128,256], index: 3, kind: output, shape index: {}]
  %s4 = sld [smem:[#allocation0]]
  $region45: #{tpu_custom_call.1} parent=0
    _
  %s6 = ssub.s32 1, %s4
  %s7 = scalar_select 0, %s6, %s4
  $region1: #{tpu_custom_call.1} parent=0
    #allocation2 [shape = 'u8[131072]{0}', space=vmem, size = 0x20000, scoped, tag = 'output window, operand 0']
    #allocation3 [shape = 's32[2]{0}', space=sflag, size = 0x8, scoped, tag = 'scoped memory for tpu_custom_call.1']
    %8 = vsyncpa [#allocation3], 0
    %s9 = scalar_lea.sflag [#allocation3], 1
    %10 = vsyncpa %s9, 0
    loop: start=0, step=1, limit=6
    $region2: #{tpu_custom_call.1} parent=1 // loop_pre_header
      _
    $region3: #{tpu_custom_call.1} parent=1 // loop_header
      %s12 = sphi 0, %s16
      %p13 = scmp.ge.s32.totalorder %s12, 6
      %s19 = sphi 0, %s31
      %s20 = sphi 0, %s27
      %s21 = sphi 0, %s19
      %s22 = sphi 0, %s20
      %s23 = sphi 0, %s21
      %s24 = sphi 0, %s22
      %s36 = sphi 0, %s38
      %s39 = sphi 0, %s36
      %s40 = sphi 0, %s39
      %s56 = sphi 0, %s40
      %s60 = sphi 0, %s60
      %s62 = sphi 0, %s60
      %s63 = sphi 0, %s62
      %s77 = sphi 0, %s63
      %s81 = sphi 0, %s81
      %s83 = sphi 0, %s81
      %s84 = sphi 0, %s83
      %s98 = sphi 0, %s84
      %s106 = sphi 0, %s108
      %s109 = sphi 0, %s106
      %s110 = sphi 0, %s109
      %s126 = sphi 0, %s110
    $region4: #{tpu_custom_call.1} parent=1 // loop_header_branch
      %15 = sbr.rel (%p13) target = $region8
    $region5: #{tpu_custom_call.1} parent=1 // loop_body
      %s17 = ssub.s32 %s12, 1
      %s18 = ssub.s32 %s12, 2
      %s25 = sadd.s32 1, %s20
      %p26 = scmp.ge.s32.totalorder %s25, 2
      %s27 = scalar_select %p26, 0, %s25
      %s28 = sadd.s32 1, %s19
      %s29 = scalar_select %p26, %s28, %s19
      %p30 = scmp.ge.s32.totalorder %s29, 2
      %s31 = scalar_select %p30, 0, %s29
      %s32 = ssub.s32 %s19, %s31
      %s33 = ssub.s32 %s20, %s27
      %s34 = sor.u32 %s32, %s33
      %p35 = scmp.eq.s32.totalorder %s34, 0
      %s37 = sadd.s32 %s36, 1
      %s38 = scalar_select %p35, %s36, %s37
      %p41 = pneg %p35
      %p42 = scmp.eq.s32.totalorder %s12, 3
      %p43 = por %p41, %p42
      %p44 = scmp.ne.s32.totalorder %s36, %s39
      %p45 = scmp.eq.s32.totalorder %s12, 0
      %p46 = por %p44, %p45
      %p47 = scmp.ne.s32.totalorder %s36, %s39
      %p48 = scmp.eq.s32.totalorder %s17, 3
      %p49 = por %p47, %p48
      %p50 = scmp.ne.s32.totalorder %s39, %s40
      %p51 = scmp.eq.s32.totalorder %s17, 0
      %p52 = por %p50, %p51
      %p53 = scmp.ne.s32.totalorder %s39, %s40
      %p54 = scmp.eq.s32.totalorder %s18, 3
      %p55 = por %p53, %p54
      %p57 = scmp.ne.s32.totalorder %s40, %s56
      %p58 = scmp.eq.s32.totalorder %s18, 0
      %p59 = por %p57, %p58
      %s61 = sadd.s32 %s60, 1
      %p64 = scmp.eq.s32.totalorder %s12, 3
      %p65 = scmp.ne.s32.totalorder %s60, %s62
      %p66 = scmp.eq.s32.totalorder %s12, 0
      %p67 = por %p65, %p66
      %p68 = scmp.ne.s32.totalorder %s60, %s62
      %p69 = scmp.eq.s32.totalorder %s17, 3
      %p70 = por %p68, %p69
      %p71 = scmp.ne.s32.totalorder %s62, %s63
      %p72 = scmp.eq.s32.totalorder %s17, 0
      %p73 = por %p71, %p72
      %p74 = scmp.ne.s32.totalorder %s62, %s63
      %p75 = scmp.eq.s32.totalorder %s18, 3
      %p76 = por %p74, %p75
      %p78 = scmp.ne.s32.totalorder %s63, %s77
      %p79 = scmp.eq.s32.totalorder %s18, 0
      %p80 = por %p78, %p79
      %s82 = sadd.s32 %s81, 1
      %p85 = scmp.eq.s32.totalorder %s12, 3
      %p86 = scmp.ne.s32.totalorder %s81, %s83
      %p87 = scmp.eq.s32.totalorder %s12, 0
      %p88 = por %p86, %p87
      %p89 = scmp.ne.s32.totalorder %s81, %s83
      %p90 = scmp.eq.s32.totalorder %s17, 3
      %p91 = por %p89, %p90
      %p92 = scmp.ne.s32.totalorder %s83, %s84
      %p93 = scmp.eq.s32.totalorder %s17, 0
      %p94 = por %p92, %p93
      %p95 = scmp.ne.s32.totalorder %s83, %s84
      %p96 = scmp.eq.s32.totalorder %s18, 3
      %p97 = por %p95, %p96
      %p99 = scmp.ne.s32.totalorder %s84, %s98
      %p100 = scmp.eq.s32.totalorder %s18, 0
      %p101 = por %p99, %p100
      %s102 = ssub.s32 %s19, %s31
      %s103 = ssub.s32 %s20, %s27
      %s104 = sor.u32 %s102, %s103
      %p105 = scmp.eq.s32.totalorder %s104, 0
      %s107 = sadd.s32 %s106, 1
      %s108 = scalar_select %p105, %s106, %s107
      %p111 = pneg %p105
      %p112 = scmp.eq.s32.totalorder %s12, 3
      %p113 = por %p111, %p112
      %p114 = scmp.ne.s32.totalorder %s106, %s109
      %p115 = scmp.eq.s32.totalorder %s12, 0
      %p116 = por %p114, %p115
      %p117 = scmp.ne.s32.totalorder %s106, %s109
      %p118 = scmp.eq.s32.totalorder %s17, 3
      %p119 = por %p117, %p118
      %p120 = scmp.ne.s32.totalorder %s109, %s110
      %p121 = scmp.eq.s32.totalorder %s17, 0
      %p122 = por %p120, %p121
      %p123 = scmp.ne.s32.totalorder %s109, %s110
      %p124 = scmp.eq.s32.totalorder %s18, 3
      %p125 = por %p123, %p124
      %p127 = scmp.ne.s32.totalorder %s110, %s126
      %p128 = scmp.eq.s32.totalorder %s18, 0
      %p129 = por %p127, %p128
      %p130 = scmp.le.s32.totalorder 1, %s12
      %p131 = scmp.lt.s32.totalorder %s12, 5
      %p132 = pnand %p130, %p131
      %p133 = pneg %p132
      // Predicated region
      $region9: #{tpu_custom_call.1} parent=5 // pred_check
        _
      $region10: #{tpu_custom_call.1} parent=5 // pred_check_branch
        %135 = sbr.rel (%p132) target = $region12
      $region11: #{tpu_custom_call.1} parent=5 // pred_region
        %s136 = ssub.s32 %s12, 1
        // Predicated region
        $region13: #{tpu_custom_call.1} parent=11 // pred_check
          %p137 = pneg %p73
        $region14: #{tpu_custom_call.1} parent=11 // pred_check_branch
          %139 = sbr.rel (%p137) target = $region16
        $region15: #{tpu_custom_call.1} parent=11 // pred_region
          _
        $region16: #{tpu_custom_call.1} parent=11 // pred_fallthru
          _
        // Predicated region
        $region17: #{tpu_custom_call.1} parent=11 // pred_check
          %p140 = pneg %p94
        $region18: #{tpu_custom_call.1} parent=11 // pred_check_branch
          %142 = sbr.rel (%p140) target = $region20
        $region19: #{tpu_custom_call.1} parent=11 // pred_region
          _
        $region20: #{tpu_custom_call.1} parent=11 // pred_fallthru
          _
      $region12: #{tpu_custom_call.1} parent=5 // pred_fallthru
        _
      %p143 = scmp.lt.s32.totalorder %s12, 4
      // Predicated region
      $region21: #{tpu_custom_call.1} parent=5 // pred_check
        %p144 = pneg %p143
      $region22: #{tpu_custom_call.1} parent=5 // pred_check_branch
        %146 = sbr.rel (%p144) target = $region24
      $region23: #{tpu_custom_call.1} parent=5 // pred_region
        // Predicated region
        $region25: #{tpu_custom_call.1} parent=23 // pred_check
          %p147 = pneg %p46
        $region26: #{tpu_custom_call.1} parent=23 // pred_check_branch
          %149 = sbr.rel (%p147) target = $region28
        $region27: #{tpu_custom_call.1} parent=23 // pred_region
          %p150 = scmp.lt.s32.totalorder %s19, 1
          %s151 = scalar_select %p150, %s19, 1
          %p152 = scmp.lt.s32.totalorder %s20, 1
          %s153 = scalar_select %p152, %s20, 1
          %s154 = smul.addr %s151, 2
          %s155 = sadd.s32 %s153, %s154
          %s156 = smul.addr %s155, 4
          %s157 = scalar_lea.vmem %s0, %s156
        $region28: #{tpu_custom_call.1} parent=23 // pred_fallthru
          _
      $region24: #{tpu_custom_call.1} parent=5 // pred_fallthru
        _
      %p158 = scmp.le.s32.totalorder 1, %s12
      %p159 = scmp.lt.s32.totalorder %s12, 5
      %p160 = pnand %p158, %p159
      %p161 = pneg %p160
      // Predicated region
      $region29: #{tpu_custom_call.1} parent=5 // pred_check
        _
      $region30: #{tpu_custom_call.1} parent=5 // pred_check_branch
        %163 = sbr.rel (%p160) target = $region32
      $region31: #{tpu_custom_call.1} parent=5 // pred_region
        %s164 = ssub.s32 %s12, 1
        %p165 = scmp.lt.s32.totalorder %s21, 1
        %s166 = scalar_select %p165, %s21, 1
        %p167 = scmp.lt.s32.totalorder %s22, 1
        %s168 = scalar_select %p167, %s22, 1
        %s169 = smul.addr %s166, 2
        %s170 = sadd.s32 %s168, %s169
        %s171 = smul.addr %s170, 4
        %s172 = scalar_lea.vmem %s0, %s171
        %p173 = pneg %p52
        %p174 = pneg %p49
        %p175 = pneg %p73
        %p176 = pneg %p70
        %p177 = pneg %p94
        %p178 = pneg %p91
        %p179 = pneg %p122
        %p180 = pneg %p119
        %s181 = sand.u32 %s109, 1
        %s182 = scalar_lea.sflag [#allocation3], %s181
        %s183 = sand.u32 %s109, 1
        %s184 = smul.addr %s183, 128
        %s185 = scalar_lea.vmem [#allocation2], %s184
        %p186 = scmp.lt.s32.totalorder %s21, 1
        %s187 = scalar_select %p186, %s21, 1
        %p188 = scmp.lt.s32.totalorder %s22, 1
        %s189 = scalar_select %p188, %s22, 1
        %s190 = smul.addr %s187, 2
        %s191 = sadd.s32 %s189, %s190
        %s192 = smul.addr %s191, 4
        %s193 = scalar_lea.vmem %s0, %s192
        %v195 = vld [vmem:[%s193] sm:$0xf]
        %v196 = vpack.c.bf16 %v195, %v195
        %v197 = vld [vmem:[%s1] sm:$0xff]
        %v198 = vld [vmem:[%s1 + $0x8] sm:$0xff]
        %v199 = vld [vmem:[%s1 + $0x10] sm:$0xff]
        %v200 = vld [vmem:[%s1 + $0x18] sm:$0xff]
        %v201 = vld [vmem:[%s1 + $0x20] sm:$0xff]
        %v202 = vld [vmem:[%s1 + $0x28] sm:$0xff]
        %v203 = vld [vmem:[%s1 + $0x30] sm:$0xff]
        %v204 = vld [vmem:[%s1 + $0x38] sm:$0xff]
        %v205 = vld [vmem:[%s1 + $0x40] sm:$0xff]
        %v206 = vld [vmem:[%s1 + $0x48] sm:$0xff]
        %v207 = vld [vmem:[%s1 + $0x50] sm:$0xff]
        %v208 = vld [vmem:[%s1 + $0x58] sm:$0xff]
        %v209 = vld [vmem:[%s1 + $0x60] sm:$0xff]
        %v210 = vld [vmem:[%s1 + $0x68] sm:$0xff]
        %v211 = vld [vmem:[%s1 + $0x70] sm:$0xff]
        %v212 = vld [vmem:[%s1 + $0x78] sm:$0xff]
        %v213 = vpack.c.bf16 %v198, %v197
        %v214 = vpack.c.bf16 %v200, %v199
        %v215 = vpack.c.bf16 %v202, %v201
        %v216 = vpack.c.bf16 %v204, %v203
        %v217 = vpack.c.bf16 %v206, %v205
        %v218 = vpack.c.bf16 %v208, %v207
        %v219 = vpack.c.bf16 %v210, %v209
        %v220 = vpack.c.bf16 %v212, %v211
        %v221 = vld [vmem:[%s2] sm:$0xff]
        %v222 = vld [vmem:[%s2 + $0x8] sm:$0xff]
        %v223 = vld [vmem:[%s2 + $0x10] sm:$0xff]
        %v224 = vld [vmem:[%s2 + $0x18] sm:$0xff]
        %v225 = vld [vmem:[%s2 + $0x20] sm:$0xff]
        %v226 = vld [vmem:[%s2 + $0x28] sm:$0xff]
        %v227 = vld [vmem:[%s2 + $0x30] sm:$0xff]
        %v228 = vld [vmem:[%s2 + $0x38] sm:$0xff]
        %v229 = vld [vmem:[%s2 + $0x40] sm:$0xff]
        %v230 = vld [vmem:[%s2 + $0x48] sm:$0xff]
        %v231 = vld [vmem:[%s2 + $0x50] sm:$0xff]
        %v232 = vld [vmem:[%s2 + $0x58] sm:$0xff]
        %v233 = vld [vmem:[%s2 + $0x60] sm:$0xff]
        %v234 = vld [vmem:[%s2 + $0x68] sm:$0xff]
        %v235 = vld [vmem:[%s2 + $0x70] sm:$0xff]
        %v236 = vld [vmem:[%s2 + $0x78] sm:$0xff]
        %238 = vset.pattern.permute.xlu0 0
        %239 = vperm.xlu0 %238, %v221
        %v240 = vpop.permute.xlu0 %239
        %243 = vset.pattern.permute.xlu0 0
        %244 = vperm.xlu0 %243, %v222
        %v245 = vpop.permute.xlu0 %244
        %248 = vset.pattern.permute.xlu0 0
        %249 = vperm.xlu0 %248, %v223
        %v250 = vpop.permute.xlu0 %249
        %253 = vset.pattern.permute.xlu0 0
        %254 = vperm.xlu0 %253, %v224
        %v255 = vpop.permute.xlu0 %254
        %258 = vset.pattern.permute.xlu0 0
        %259 = vperm.xlu0 %258, %v225
        %v260 = vpop.permute.xlu0 %259
        %263 = vset.pattern.permute.xlu0 0
        %264 = vperm.xlu0 %263, %v226
        %v265 = vpop.permute.xlu0 %264
        %268 = vset.pattern.permute.xlu0 0
        %269 = vperm.xlu0 %268, %v227
        %v270 = vpop.permute.xlu0 %269
        %273 = vset.pattern.permute.xlu0 0
        %274 = vperm.xlu0 %273, %v228
        %v275 = vpop.permute.xlu0 %274
        %278 = vset.pattern.permute.xlu0 0
        %279 = vperm.xlu0 %278, %v229
        %v280 = vpop.permute.xlu0 %279
        %283 = vset.pattern.permute.xlu0 0
        %284 = vperm.xlu0 %283, %v230
        %v285 = vpop.permute.xlu0 %284
        %288 = vset.pattern.permute.xlu0 0
        %289 = vperm.xlu0 %288, %v231
        %v290 = vpop.permute.xlu0 %289
        %293 = vset.pattern.permute.xlu0 0
        %294 = vperm.xlu0 %293, %v232
        %v295 = vpop.permute.xlu0 %294
        %298 = vset.pattern.permute.xlu0 0
        %299 = vperm.xlu0 %298, %v233
        %v300 = vpop.permute.xlu0 %299
        %303 = vset.pattern.permute.xlu0 0
        %304 = vperm.xlu0 %303, %v234
        %v305 = vpop.permute.xlu0 %304
        %308 = vset.pattern.permute.xlu0 0
        %309 = vperm.xlu0 %308, %v235
        %v310 = vpop.permute.xlu0 %309
        %313 = vset.pattern.permute.xlu0 0
        %314 = vperm.xlu0 %313, %v236
        %v315 = vpop.permute.xlu0 %314
        %vm317 = vcmask 31744
        %v319 = vsel %vm317, %v213, 0
        %v322 = vsel %vm317, %v214, 0
        %v325 = vsel %vm317, %v215, 0
        %v328 = vsel %vm317, %v216, 0
        %v331 = vsel %vm317, %v217, 0
        %v334 = vsel %vm317, %v218, 0
        %v337 = vsel %vm317, %v219, 0
        %v340 = vsel %vm317, %v220, 0
        %vm342 = vcmask 1041408
        %v344 = vsel %vm342, %v196, 0
        %346 = vmatprep.subr.bf16.mxu0 0
        %347 = vmatpush1.bf16.msra.mxu0 %v344
        %348 = vmatprep.subr.bf16.mxu0 0
        %349 = vmatpush1.bf16.msra.mxu0 0
        %350 = vmatprep.subr.bf16.mxu0 0
        %351 = vmatpush1.bf16.msra.mxu0 0
        %352 = vmatprep.subr.bf16.mxu0 0
        %353 = vmatpush1.bf16.msra.mxu0 0
        %354 = vmatprep.subr.bf16.mxu0 0
        %355 = vmatpush1.bf16.msra.mxu0 0
        %356 = vmatprep.subr.bf16.mxu0 0
        %357 = vmatpush1.bf16.msra.mxu0 0
        %358 = vmatprep.subr.bf16.mxu0 0
        %359 = vmatpush1.bf16.msra.mxu0 0
        %360 = vmatprep.subr.bf16.mxu0 0
        %361 = vmatpush1.bf16.msra.mxu0 0
        %362 = vmatprep.subr.bf16.mxu0 0
        %363 = vmatpush1.bf16.msra.mxu0 0
        %364 = vmatprep.subr.bf16.mxu0 0
        %365 = vmatpush1.bf16.msra.mxu0 0
        %366 = vmatprep.subr.bf16.mxu0 0
        %367 = vmatpush1.bf16.msra.mxu0 0
        %368 = vmatprep.subr.bf16.mxu0 0
        %369 = vmatpush1.bf16.msra.mxu0 0
        %370 = vmatprep.subr.bf16.mxu0 0
        %371 = vmatpush1.bf16.msra.mxu0 0
        %372 = vmatprep.subr.bf16.mxu0 0
        %373 = vmatpush1.bf16.msra.mxu0 0
        %374 = vmatprep.subr.bf16.mxu0 0
        %375 = vmatpush1.bf16.msra.mxu0 0
        %376 = vmatprep.subr.bf16.mxu0 0
        %377 = vmatpush1.bf16.msra.mxu0 0
        %378 = vmatprep.mubr.bf16.mxu0 0
        %379 = vmatmul.mubr.bf16.gmra.mrb[0].mxu0 %v319
        %v380 = vpop.f32.mrb[0].mxu0
        %v381 = vadd.f32 %v240, %v380
        %v382 = vpop.f32.mrb[0].mxu0
        %v383 = vpop.f32.mrb[0].mxu0
        %v384 = vadd.f32 %v245, %v383
        %v385 = vpop.f32.mrb[0].mxu0
        %386 = vmatprep.mubr.bf16.mxu0 0
        %387 = vmatmul.mubr.bf16.gmra.mrb[0].mxu0 %v322
        %v388 = vpop.f32.mrb[0].mxu0
        %v389 = vadd.f32 %v250, %v388
        %v390 = vpop.f32.mrb[0].mxu0
        %v391 = vpop.f32.mrb[0].mxu0
        %v392 = vadd.f32 %v255, %v391
        %v393 = vpop.f32.mrb[0].mxu0
        %394 = vmatprep.mubr.bf16.mxu0 0
        %395 = vmatmul.mubr.bf16.gmra.mrb[0].mxu0 %v325
        %v396 = vpop.f32.mrb[0].mxu0
        %v397 = vadd.f32 %v260, %v396
        %v398 = vpop.f32.mrb[0].mxu0
        %v399 = vpop.f32.mrb[0].mxu0
        %v400 = vadd.f32 %v265, %v399
        %v401 = vpop.f32.mrb[0].mxu0
        %402 = vmatprep.mubr.bf16.mxu0 0
        %403 = vmatmul.mubr.bf16.gmra.mrb[0].mxu0 %v328
        %v404 = vpop.f32.mrb[0].mxu0
        %v405 = vadd.f32 %v270, %v404
        %v406 = vpop.f32.mrb[0].mxu0
        %v407 = vpop.f32.mrb[0].mxu0
        %v408 = vadd.f32 %v275, %v407
        %v409 = vpop.f32.mrb[0].mxu0
        %410 = vmatprep.mubr.bf16.mxu0 0
        %411 = vmatmul.mubr.bf16.gmra.mrb[0].mxu0 %v331
        %v412 = vpop.f32.mrb[0].mxu0
        %v413 = vadd.f32 %v280, %v412
        %v414 = vpop.f32.mrb[0].mxu0
        %v415 = vpop.f32.mrb[0].mxu0
        %v416 = vadd.f32 %v285, %v415
        %v417 = vpop.f32.mrb[0].mxu0
        %418 = vmatprep.mubr.bf16.mxu0 0
        %419 = vmatmul.mubr.bf16.gmra.mrb[0].mxu0 %v334
        %v420 = vpop.f32.mrb[0].mxu0
        %v421 = vadd.f32 %v290, %v420
        %v422 = vpop.f32.mrb[0].mxu0
        %v423 = vpop.f32.mrb[0].mxu0
        %v424 = vadd.f32 %v295, %v423
        %v425 = vpop.f32.mrb[0].mxu0
        %426 = vmatprep.mubr.bf16.mxu0 0
        %427 = vmatmul.mubr.bf16.gmra.mrb[0].mxu0 %v337
        %v428 = vpop.f32.mrb[0].mxu0
        %v429 = vadd.f32 %v300, %v428
        %v430 = vpop.f32.mrb[0].mxu0
        %v431 = vpop.f32.mrb[0].mxu0
        %v432 = vadd.f32 %v305, %v431
        %v433 = vpop.f32.mrb[0].mxu0
        %434 = vmatprep.mubr.bf16.mxu0 0
        %435 = vmatmul.mubr.bf16.gmra.mrb[0].mxu0 %v340
        %v436 = vpop.f32.mrb[0].mxu0
        %v437 = vadd.f32 %v310, %v436
        %v438 = vpop.f32.mrb[0].mxu0
        %v439 = vpop.f32.mrb[0].mxu0
        %v440 = vadd.f32 %v315, %v439
        %v441 = vpop.f32.mrb[0].mxu0
        %442 = vdwg.mxu0
        %443 = vst [vmem:[%s185] sm:$0xff] %v381
        %444 = vst [vmem:[%s185 + $0x8] sm:$0xff] %v384
        %445 = vst [vmem:[%s185 + $0x10] sm:$0xff] %v389
        %446 = vst [vmem:[%s185 + $0x18] sm:$0xff] %v392
        %447 = vst [vmem:[%s185 + $0x20] sm:$0xff] %v397
        %448 = vst [vmem:[%s185 + $0x28] sm:$0xff] %v400
        %449 = vst [vmem:[%s185 + $0x30] sm:$0xff] %v405
        %450 = vst [vmem:[%s185 + $0x38] sm:$0xff] %v408
        %451 = vst [vmem:[%s185 + $0x40] sm:$0xff] %v413
        %452 = vst [vmem:[%s185 + $0x48] sm:$0xff] %v416
        %453 = vst [vmem:[%s185 + $0x50] sm:$0xff] %v421
        %454 = vst [vmem:[%s185 + $0x58] sm:$0xff] %v424
        %455 = vst [vmem:[%s185 + $0x60] sm:$0xff] %v429
        %456 = vst [vmem:[%s185 + $0x68] sm:$0xff] %v432
        %457 = vst [vmem:[%s185 + $0x70] sm:$0xff] %v437
        %458 = vst [vmem:[%s185 + $0x78] sm:$0xff] %v440
        %s459 = sand.u32 %s109, 1
        %s460 = scalar_lea.sflag [#allocation3], %s459
        %s461 = sand.u32 %s109, 1
        %s462 = smul.addr %s461, 128
        %s463 = scalar_lea.vmem [#allocation2], %s462
        // Predicated region
        $region33: #{tpu_custom_call.1} parent=31 // pred_check
          %p464 = pneg %p119
        $region34: #{tpu_custom_call.1} parent=31 // pred_check_branch
          %466 = sbr.rel (%p464) target = $region36
        $region35: #{tpu_custom_call.1} parent=31 // pred_region
          %s468 = ssub.s32 2048, 2048
          %469 = vsyncadd %s460, %s468
          %s470 = smul.addr %s21, 32
          %s471 = sadd.s32 %s22, %s470
          %s472 = smul.addr %s471, 128
          %s473 = scalar_lea.hbm %s3, %s472
          %s474 = sshll.u32 %s463, 4
          %s475 = int_to_ptr.vmem [resolvable:$true] %s474
          %480 = dma.vmem_to_hbm [thread:$0]  %s475, 2048, %s473, %s460, 128, 256, 8
        $region36: #{tpu_custom_call.1} parent=31 // pred_fallthru
          _
      $region32: #{tpu_custom_call.1} parent=5 // pred_fallthru
        _
      %p481 = scmp.le.s32.totalorder 2, %s12
      // Predicated region
      $region37: #{tpu_custom_call.1} parent=5 // pred_check
        %p482 = pneg %p481
      $region38: #{tpu_custom_call.1} parent=5 // pred_check_branch
        %484 = sbr.rel (%p482) target = $region40
      $region39: #{tpu_custom_call.1} parent=5 // pred_region
        %s485 = ssub.s32 %s12, 2
        // Predicated region
        $region41: #{tpu_custom_call.1} parent=39 // pred_check
          %p486 = pneg %p125
        $region42: #{tpu_custom_call.1} parent=39 // pred_check_branch
          %488 = sbr.rel (%p486) target = $region44
        $region43: #{tpu_custom_call.1} parent=39 // pred_region
          %s489 = sand.u32 %s110, 1
          %s490 = scalar_lea.sflag [#allocation3], %s489
          %s491 = sand.u32 %s110, 1
          %s492 = smul.addr %s491, 128
          %s493 = scalar_lea.vmem [#allocation2], %s492
          %494 = dma.done %s490, 2048
        $region44: #{tpu_custom_call.1} parent=39 // pred_fallthru
          _
      $region40: #{tpu_custom_call.1} parent=5 // pred_fallthru
        _
    $region6: #{tpu_custom_call.1} parent=1 // loop_footer
      %s16 = sadd.s32 1, %s12
    $region7: #{tpu_custom_call.1} parent=1 // loop_footer_branch
      %11 = sbr.rel target = $region3
    $region8: #{tpu_custom_call.1} parent=1 // loop_exit
      _
    %495 = vsyncpa [#allocation3], 1
    %s496 = scalar_lea.sflag [#allocation3], 1
    %497 = vsyncpa %s496, 1

</llo_original>
